<compile_context>
chip_gen: v7x
topology: tpu7x:2x2x1
jax: 0.10.0
libtpu: 0.0.40
codegen_flags: <defaults>
</compile_context>

<pallas_src>
import jax
import jax.numpy as jnp
from jax.experimental import pallas as pl
from jax.experimental.pallas import tpu as pltpu

# ---- model hyper-parameters (synthetic VNet.Config) -------------------------
DIM_FEAT = 32
DIM_HIDDEN = (64, 64)     # cfg.dim_hidden
# act_cls='tanh', bias=True, use_bn=False, use_ln=False, ortho_init=False

LANE = 128                # TPU lane width; the batch rides the lane axis
TB_MAX = 512              # max batch rows per grid step (f32; far below VMEM)


def _round_up(x, m):
    return (x + m - 1) // m * m


def vnet_kernel(x_ref, w1_ref, b1_ref, w2_ref, b2_ref, w3_ref, b3_ref, o_ref):
    """One batch tile: tanh(W1 x^T + b1) -> tanh(W2 . + b2) -> w3 . + b3."""
    # [TB, F] -> [F, TB]: one transpose (folded into / fed to the MXU) so every
    # activation keeps the batch on the fast lane axis and the output tile is
    # naturally lane-dense.
    xt = x_ref[...].T                                                # [F,  TB]
    h1 = jnp.tanh(
        jnp.dot(w1_ref[...], xt, preferred_element_type=jnp.float32)
        + b1_ref[...])                                               # [H1, TB]
    h2 = jnp.tanh(
        jnp.dot(w2_ref[...], h1, preferred_element_type=jnp.float32)
        + b2_ref[...])                                               # [H2, TB]
    # Final projection to one value per batch element on VPU + XLU instead of
    # an N=1 MXU matmul (which would waste nearly all MXU lanes and produce a
    # 1-lane output tile).
    v = jnp.sum(h2 * w3_ref[...], axis=0, keepdims=True) + b3_ref[0]  # [1, TB]
    o_ref[...] = v.astype(o_ref.dtype)


def vnet_forward(x, params, *, tb_max=TB_MAX):
    """x: [B, F] float32 -> [B] float32 (value, squeezed). params in PyTorch layout."""
    (w1, b1), (w2, b2), (w3, b3) = params            # w: [out, in], b: [out]
    B, F = x.shape
    H1 = w1.shape[0]
    H2 = w2.shape[0]

    # ---- lane-dense batch tiling -------------------------------------------
    # The batch sits on the lane (last) axis of the output, so the tile must be
    # a multiple of 128.  Use the largest tile up to tb_max, but keep >= 2 grid
    # steps when possible so the "parallel" batch axis can be split across the
    # two v7x TensorCores.
    bp = _round_up(B, LANE)
    tb = min(tb_max, bp)
    if bp // tb < 2 and bp > LANE:
        tb = max(LANE, _round_up(bp // 2, LANE))
    bp = _round_up(bp, tb)
    grid_b = bp // tb

    if bp != B:
        x = jnp.pad(x, ((0, bp - B), (0, 0)))        # zero rows; sliced off below

    # Tiny parameter reshapes into the layouts the kernel consumes.
    b1c = b1.reshape(H1, 1)          # column bias broadcasts along the lane axis
    b2c = b2.reshape(H2, 1)
    w3c = w3.reshape(H2, 1)          # last layer as a column for the VPU reduce
    b3s = b3.reshape(1)              # single scalar -> SMEM

    out = pl.pallas_call(
        vnet_kernel,
        out_shape=jax.ShapeDtypeStruct((1, bp), jnp.float32),
        grid_spec=pltpu.PrefetchScalarGridSpec(
            num_scalar_prefetch=0,
            grid=(grid_b,),
            in_specs=[
                pl.BlockSpec((tb, F), lambda i: (i, 0)),            # x tile
                pl.BlockSpec((H1, F), lambda i: (0, 0)),            # W1 [out, in]
                pl.BlockSpec((H1, 1), lambda i: (0, 0)),            # b1 column
                pl.BlockSpec((H2, H1), lambda i: (0, 0)),           # W2 [out, in]
                pl.BlockSpec((H2, 1), lambda i: (0, 0)),            # b2 column
                pl.BlockSpec((H2, 1), lambda i: (0, 0)),            # W3 column
                pl.BlockSpec(memory_space=pltpu.MemorySpace.SMEM),  # b3 scalar
            ],
            out_specs=pl.BlockSpec((1, tb), lambda i: (0, i)),      # lane-dense row
        ),
        compiler_params=pltpu.CompilerParams(
            dimension_semantics=("parallel",)),
    )(x, w1, b1c, w2, b2c, w3c, b3s)

    # value(x).squeeze(-1) from the PyTorch forward (drop batch padding).
    return out[0, :B]


def init_params(key):
    """Deterministic synthetic init matching nn.Linear layouts: W [out, in], b [out]."""
    dims = (DIM_FEAT,) + DIM_HIDDEN + (1,)
    params = []
    for d_in, d_out in zip(dims[:-1], dims[1:]):
        key, kw, kb = jax.random.split(key, 3)
        scale = 1.0 / jnp.sqrt(jnp.float32(d_in))
        w = jax.random.uniform(kw, (d_out, d_in), jnp.float32, -scale, scale)
        b = jax.random.uniform(kb, (d_out,), jnp.float32, -scale, scale)
        params.append((w, b))
    return params


def vnet_ref(x, params):
    """Pure-JAX reference (PyTorch layout: y = x @ W.T + b)."""
    (w1, b1), (w2, b2), (w3, b3) = params
    hp = jax.lax.Precision.HIGHEST
    h = jnp.tanh(jnp.dot(x, w1.T, precision=hp) + b1)
    h = jnp.tanh(jnp.dot(h, w2.T, precision=hp) + b2)
    v = jnp.dot(h, w3.T, precision=hp) + b3
    return v[..., 0]


if __name__ == "__main__":
    key = jax.random.PRNGKey(0)
    key, kp = jax.random.split(key)
    params = init_params(kp)

    # Small batch exercises the padding path (single 128-lane tile); the bigger
    # batch exercises TB=512 with 2 parallel grid steps (both v7x TensorCores).
    for batch in (8, 1024):
        key, kx = jax.random.split(key)
        x = jax.random.normal(kx, (batch, DIM_FEAT), jnp.float32)

        v = jax.block_until_ready(vnet_forward(x, params))
        v_ref = vnet_ref(x, params)

        assert v.shape == (batch,), v.shape
        err = jnp.max(jnp.abs(v - v_ref))
        assert jnp.allclose(v, v_ref, atol=1e-4, rtol=1e-4), (batch, err)

    print("KERNEL_OK")
</pallas_src>

<mosaic_0001>
module attributes {stable_mosaic.version = 11 : i64} {
  func.func @vnet_kernel(%arg0: i32, %arg1: memref<128x32xf32, #tpu.memory_space<vmem>>, %arg2: memref<64x32xf32, #tpu.memory_space<vmem>>, %arg3: memref<64x1xf32, #tpu.memory_space<vmem>>, %arg4: memref<64x64xf32, #tpu.memory_space<vmem>>, %arg5: memref<64x1xf32, #tpu.memory_space<vmem>>, %arg6: memref<64x1xf32, #tpu.memory_space<vmem>>, %arg7: memref<1xf32, #tpu.memory_space<smem>>, %arg8: memref<1x128xf32, #tpu.memory_space<vmem>>) attributes {dimension_semantics = [#tpu.dimension_semantics<parallel>], iteration_bounds = array<i64: 1>, scalar_prefetch = 0 : i64, scratch_operands = 0 : i64, tpu.core_type = #tpu.core_type<tc>, window_params = [{transform_indices = @transform_0, window_bounds = array<i64: 128, 32>}, {pipeline_mode = #tpu.pipeline_mode<synchronous>, transform_indices = @transform_1, window_bounds = array<i64: 64, 32>}, {pipeline_mode = #tpu.pipeline_mode<synchronous>, transform_indices = @transform_2, window_bounds = array<i64: 64, 1>}, {pipeline_mode = #tpu.pipeline_mode<synchronous>, transform_indices = @transform_3, window_bounds = array<i64: 64, 64>}, {pipeline_mode = #tpu.pipeline_mode<synchronous>, transform_indices = @transform_4, window_bounds = array<i64: 64, 1>}, {pipeline_mode = #tpu.pipeline_mode<synchronous>, transform_indices = @transform_5, window_bounds = array<i64: 64, 1>}, {transform_indices = @transform_6, window_bounds = array<i64: 1>}, {transform_indices = @transform_7, window_bounds = array<i64: 1, 128>}]} {
    %c0 = arith.constant 0 : index
    %c0_0 = arith.constant 0 : index
    %0 = vector.load %arg1[%c0, %c0_0] : memref<128x32xf32, #tpu.memory_space<vmem>>, vector<128x32xf32>
    %1 = tpu.transpose %0, [1, 0] : vector<128x32xf32> -> vector<32x128xf32>
    %c0_1 = arith.constant 0 : index
    %c0_2 = arith.constant 0 : index
    %2 = vector.load %arg2[%c0_1, %c0_2] : memref<64x32xf32, #tpu.memory_space<vmem>>, vector<64x32xf32>
    %cst = arith.constant dense<0.000000e+00> : vector<64x128xf32>
    %3 = tpu.matmul %2, %1, %cst {dimension_numbers = #tpu.dot_dimension_numbers<[1], [0], [0], [1], [0, 0, 1, 1], [], []>} : vector<64x32xf32>, vector<32x128xf32>, vector<64x128xf32> -> vector<64x128xf32>
    %c0_3 = arith.constant 0 : index
    %c0_4 = arith.constant 0 : index
    %4 = vector.load %arg3[%c0_3, %c0_4] : memref<64x1xf32, #tpu.memory_space<vmem>>, vector<64x1xf32>
    %5 = vector.broadcast %4 : vector<64x1xf32> to vector<64x128xf32>
    %6 = arith.addf %3, %5 : vector<64x128xf32>
    %7 = math.tanh %6 : vector<64x128xf32>
    %c0_5 = arith.constant 0 : index
    %c0_6 = arith.constant 0 : index
    %8 = vector.load %arg4[%c0_5, %c0_6] : memref<64x64xf32, #tpu.memory_space<vmem>>, vector<64x64xf32>
    %cst_7 = arith.constant dense<0.000000e+00> : vector<64x128xf32>
    %9 = tpu.matmul %8, %7, %cst_7 {dimension_numbers = #tpu.dot_dimension_numbers<[1], [0], [0], [1], [0, 0, 1, 1], [], []>} : vector<64x64xf32>, vector<64x128xf32>, vector<64x128xf32> -> vector<64x128xf32>
    %c0_8 = arith.constant 0 : index
    %c0_9 = arith.constant 0 : index
    %10 = vector.load %arg5[%c0_8, %c0_9] : memref<64x1xf32, #tpu.memory_space<vmem>>, vector<64x1xf32>
    %11 = vector.broadcast %10 : vector<64x1xf32> to vector<64x128xf32>
    %12 = arith.addf %9, %11 : vector<64x128xf32>
    %13 = math.tanh %12 : vector<64x128xf32>
    %c0_10 = arith.constant 0 : index
    %c0_11 = arith.constant 0 : index
    %14 = vector.load %arg6[%c0_10, %c0_11] : memref<64x1xf32, #tpu.memory_space<vmem>>, vector<64x1xf32>
    %15 = vector.broadcast %14 : vector<64x1xf32> to vector<64x128xf32>
    %16 = arith.mulf %13, %15 : vector<64x128xf32>
    %cst_12 = arith.constant dense<0.000000e+00> : vector<128xf32>
    %17 = vector.multi_reduction <add>, %16, %cst_12 [0] : vector<64x128xf32> to vector<128xf32>
    %18 = vector.shape_cast %17 : vector<128xf32> to vector<1x128xf32>
    %c0_13 = arith.constant 0 : index
    %19 = memref.load %arg7[%c0_13] : memref<1xf32, #tpu.memory_space<smem>>
    %20 = vector.broadcast %19 : f32 to vector<1x128xf32>
    %21 = arith.addf %18, %20 : vector<1x128xf32>
    %c0_14 = arith.constant 0 : index
    %c0_15 = arith.constant 0 : index
    %22 = vector.load %arg8[%c0_14, %c0_15] : memref<1x128xf32, #tpu.memory_space<vmem>>, vector<1x128xf32>
    tpu.vector_store %arg8[%c0_14, %c0_15], %21 {strides = array<i32>} : memref<1x128xf32, #tpu.memory_space<vmem>>, vector<1x128xf32>,
    return
  }
  func.func @transform_0(%arg0: i32) -> (i32, i32) {
    %c0_i32 = arith.constant 0 : i32
    %c0_i32_0 = arith.constant 0 : i32
    return %arg0, %c0_i32 : i32, i32
  }
  func.func @transform_1(%arg0: i32) -> (i32, i32) {
    %c0_i32 = arith.constant 0 : i32
    %c0_i32_0 = arith.constant 0 : i32
    %c0_i32_1 = arith.constant 0 : i32
    return %c0_i32, %c0_i32_0 : i32, i32
  }
  func.func @transform_2(%arg0: i32) -> (i32, i32) {
    %c0_i32 = arith.constant 0 : i32
    %c0_i32_0 = arith.constant 0 : i32
    %c0_i32_1 = arith.constant 0 : i32
    return %c0_i32, %c0_i32_0 : i32, i32
  }
  func.func @transform_3(%arg0: i32) -> (i32, i32) {
    %c0_i32 = arith.constant 0 : i32
    %c0_i32_0 = arith.constant 0 : i32
    %c0_i32_1 = arith.constant 0 : i32
    return %c0_i32, %c0_i32_0 : i32, i32
  }
  func.func @transform_4(%arg0: i32) -> (i32, i32) {
    %c0_i32 = arith.constant 0 : i32
    %c0_i32_0 = arith.constant 0 : i32
    %c0_i32_1 = arith.constant 0 : i32
    return %c0_i32, %c0_i32_0 : i32, i32
  }
  func.func @transform_5(%arg0: i32) -> (i32, i32) {
    %c0_i32 = arith.constant 0 : i32
    %c0_i32_0 = arith.constant 0 : i32
    %c0_i32_1 = arith.constant 0 : i32
    return %c0_i32, %c0_i32_0 : i32, i32
  }
  func.func @transform_6(%arg0: i32) -> i32 {
    %c0_i32 = arith.constant 0 : i32
    %c0_i32_0 = arith.constant 0 : i32
    return %c0_i32 : i32
  }
  func.func @transform_7(%arg0: i32) -> (i32, i32) {
    %c0_i32 = arith.constant 0 : i32
    %c0_i32_0 = arith.constant 0 : i32
    return %c0_i32, %arg0 : i32, i32
  }
}

</mosaic_0001>

<llo_original>
// kernel: tpu_custom_call.1
$region0: #{tpu_custom_call.1}
  #allocation0 [shape = 'u32[]', space=smem, size = 0x4, offset = 0x4, fixed_abs, tag = 'smem constant byte address 0x4 - core index']
  #allocation1 [shape = 'u32[144,128]{1,0:T(1,128)}', space=vmem, size = 0x12000, scoped, tag = 'internal scratch']
  #allocation2 [shape = 'f32[1]{0:T(128)S(6)}', space=smem, size = 0x200, scoped, tag = 'scoped memory for tpu_custom_call.1']
  %s0 = inlined_call_operand.vmem [shape: f32[128,32], index: 0, kind: input, shape index: {}]
  %s1 = inlined_call_operand.vmem [shape: f32[64,32], index: 1, kind: input, shape index: {}]
  %s2 = inlined_call_operand.vmem [shape: f32[64,1], index: 2, kind: input, shape index: {}]
  %s3 = inlined_call_operand.vmem [shape: f32[64,64], index: 3, kind: input, shape index: {}]
  %s4 = inlined_call_operand.vmem [shape: f32[64,1], index: 4, kind: input, shape index: {}]
  %s5 = inlined_call_operand.vmem [shape: f32[64,1], index: 5, kind: input, shape index: {}]
  %s6 = inlined_call_operand.<no memory space> [shape: f32[1], index: 6, kind: input, shape index: {}]
  %s7 = inlined_call_operand.hbm [shape: f32[1,128], index: 7, kind: output, shape index: {}]
  %s8 = sld [smem:[#allocation0]]
  $region38: #{tpu_custom_call.1} parent=0
    _
  %s10 = ssub.s32 1, %s8
  %s11 = scalar_select 0, %s10, %s8
  %12 = sst [smem:[#allocation2]] %s6
  $region1: #{tpu_custom_call.1} parent=0
    #allocation3 [shape = 'u8[512]{0}', space=vmem, size = 0x400, scoped, tag = 'output window, operand 0, single buffered']
    #allocation4 [shape = 's32[1]{0}', space=sflag, size = 0x4, scoped, tag = 'scoped memory for tpu_custom_call.1']
    %13 = vsyncpa [#allocation4], 0
    // Predicated region
    $region2: #{tpu_custom_call.1} parent=1 // pred_check
      _
    $region3: #{tpu_custom_call.1} parent=1 // pred_check_branch
      %15 = sbr.rel (0) target = $region5
    $region4: #{tpu_custom_call.1} parent=1 // pred_region
      _
    $region5: #{tpu_custom_call.1} parent=1 // pred_fallthru
      _
    // Predicated region
    $region6: #{tpu_custom_call.1} parent=1 // pred_check
      _
    $region7: #{tpu_custom_call.1} parent=1 // pred_check_branch
      %17 = sbr.rel (0) target = $region9
    $region8: #{tpu_custom_call.1} parent=1 // pred_region
      _
    $region9: #{tpu_custom_call.1} parent=1 // pred_fallthru
      _
    // Predicated region
    $region10: #{tpu_custom_call.1} parent=1 // pred_check
      _
    $region11: #{tpu_custom_call.1} parent=1 // pred_check_branch
      %19 = sbr.rel (0) target = $region13
    $region12: #{tpu_custom_call.1} parent=1 // pred_region
      _
    $region13: #{tpu_custom_call.1} parent=1 // pred_fallthru
      _
    // Predicated region
    $region14: #{tpu_custom_call.1} parent=1 // pred_check
      _
    $region15: #{tpu_custom_call.1} parent=1 // pred_check_branch
      %21 = sbr.rel (0) target = $region17
    $region16: #{tpu_custom_call.1} parent=1 // pred_region
      _
    $region17: #{tpu_custom_call.1} parent=1 // pred_fallthru
      _
    // Predicated region
    $region18: #{tpu_custom_call.1} parent=1 // pred_check
      _
    $region19: #{tpu_custom_call.1} parent=1 // pred_check_branch
      %23 = sbr.rel (0) target = $region21
    $region20: #{tpu_custom_call.1} parent=1 // pred_region
      _
    $region21: #{tpu_custom_call.1} parent=1 // pred_fallthru
      _
    // Predicated region
    $region22: #{tpu_custom_call.1} parent=1 // pred_check
      _
    $region23: #{tpu_custom_call.1} parent=1 // pred_check_branch
      %25 = sbr.rel (0) target = $region25
    $region24: #{tpu_custom_call.1} parent=1 // pred_region
      _
    $region25: #{tpu_custom_call.1} parent=1 // pred_fallthru
      _
    // Predicated region
    $region26: #{tpu_custom_call.1} parent=1 // pred_check
      _
    $region27: #{tpu_custom_call.1} parent=1 // pred_check_branch
      %27 = sbr.rel (0) target = $region29
    $region28: #{tpu_custom_call.1} parent=1 // pred_region
      _
    $region29: #{tpu_custom_call.1} parent=1 // pred_fallthru
      _
    %v28 = vld [vmem:[%s0] sm:$0xff]
    %v29 = vld [vmem:[%s0 + $0x8] sm:$0xff]
    %v30 = vld [vmem:[%s0 + $0x10] sm:$0xff]
    %v31 = vld [vmem:[%s0 + $0x18] sm:$0xff]
    %v32 = vld [vmem:[%s0 + $0x20] sm:$0xff]
    %v33 = vld [vmem:[%s0 + $0x28] sm:$0xff]
    %v34 = vld [vmem:[%s0 + $0x30] sm:$0xff]
    %v35 = vld [vmem:[%s0 + $0x38] sm:$0xff]
    %v36 = vld [vmem:[%s0 + $0x40] sm:$0xff]
    %v37 = vld [vmem:[%s0 + $0x48] sm:$0xff]
    %v38 = vld [vmem:[%s0 + $0x50] sm:$0xff]
    %v39 = vld [vmem:[%s0 + $0x58] sm:$0xff]
    %v40 = vld [vmem:[%s0 + $0x60] sm:$0xff]
    %v41 = vld [vmem:[%s0 + $0x68] sm:$0xff]
    %v42 = vld [vmem:[%s0 + $0x70] sm:$0xff]
    %v43 = vld [vmem:[%s0 + $0x78] sm:$0xff]
    %v44 = vld [vmem:[%s1] sm:$0xff]
    %v45 = vld [vmem:[%s1 + $0x8] sm:$0xff]
    %v46 = vld [vmem:[%s1 + $0x10] sm:$0xff]
    %v47 = vld [vmem:[%s1 + $0x18] sm:$0xff]
    %v48 = vld [vmem:[%s1 + $0x20] sm:$0xff]
    %v49 = vld [vmem:[%s1 + $0x28] sm:$0xff]
    %v50 = vld [vmem:[%s1 + $0x30] sm:$0xff]
    %v51 = vld [vmem:[%s1 + $0x38] sm:$0xff]
    %v52 = vld [vmem:[%s2] sm:$0xff]
    %v53 = vld [vmem:[%s2 + $0x8] sm:$0xff]
    %v54 = vld [vmem:[%s2 + $0x10] sm:$0xff]
    %v55 = vld [vmem:[%s2 + $0x18] sm:$0xff]
    %v56 = vld [vmem:[%s2 + $0x20] sm:$0xff]
    %v57 = vld [vmem:[%s2 + $0x28] sm:$0xff]
    %v58 = vld [vmem:[%s2 + $0x30] sm:$0xff]
    %v59 = vld [vmem:[%s2 + $0x38] sm:$0xff]
    %61 = vset.pattern.permute.xlu0 0
    %62 = vperm.xlu0 %61, %v52
    %v63 = vpop.permute.xlu0 %62
    %66 = vset.pattern.permute.xlu0 0
    %67 = vperm.xlu0 %66, %v53
    %v68 = vpop.permute.xlu0 %67
    %71 = vset.pattern.permute.xlu0 0
    %72 = vperm.xlu0 %71, %v54
    %v73 = vpop.permute.xlu0 %72
    %76 = vset.pattern.permute.xlu0 0
    %77 = vperm.xlu0 %76, %v55
    %v78 = vpop.permute.xlu0 %77
    %81 = vset.pattern.permute.xlu0 0
    %82 = vperm.xlu0 %81, %v56
    %v83 = vpop.permute.xlu0 %82
    %86 = vset.pattern.permute.xlu0 0
    %87 = vperm.xlu0 %86, %v57
    %v88 = vpop.permute.xlu0 %87
    %91 = vset.pattern.permute.xlu0 0
    %92 = vperm.xlu0 %91, %v58
    %v93 = vpop.permute.xlu0 %92
    %96 = vset.pattern.permute.xlu0 0
    %97 = vperm.xlu0 %96, %v59
    %v98 = vpop.permute.xlu0 %97
    %vm100 = vcmask 261120
    %v102 = vsel %vm100, %v44, 0
    %v105 = vsel %vm100, %v45, 0
    %v108 = vsel %vm100, %v46, 0
    %v111 = vsel %vm100, %v47, 0
    %v114 = vsel %vm100, %v48, 0
    %v117 = vsel %vm100, %v49, 0
    %v120 = vsel %vm100, %v50, 0
    %v123 = vsel %vm100, %v51, 0
    %v126 = vsel %vm100, %v28, 0
    %v129 = vsel %vm100, %v29, 0
    %v132 = vsel %vm100, %v30, 0
    %v135 = vsel %vm100, %v31, 0
    %v138 = vsel %vm100, %v32, 0
    %v141 = vsel %vm100, %v33, 0
    %v144 = vsel %vm100, %v34, 0
    %v147 = vsel %vm100, %v35, 0
    %v150 = vsel %vm100, %v36, 0
    %v153 = vsel %vm100, %v37, 0
    %v156 = vsel %vm100, %v38, 0
    %v159 = vsel %vm100, %v39, 0
    %v162 = vsel %vm100, %v40, 0
    %v165 = vsel %vm100, %v41, 0
    %v168 = vsel %vm100, %v42, 0
    %v171 = vsel %vm100, %v43, 0
    %173 = vmatprep.subr.mxu0 0.0
    %174 = vmatpush1.xpose.msra.mxu0 %v126
    %175 = vmatprep.subr.mxu0 0.0
    %176 = vmatpush1.xpose.msra.mxu0 %v129
    %177 = vmatprep.subr.mxu0 0.0
    %178 = vmatpush1.xpose.msra.mxu0 %v132
    %179 = vmatprep.subr.mxu0 0.0
    %180 = vmatpush1.xpose.msra.mxu0 %v135
    %181 = vmatprep.subr.mxu0 0.0
    %182 = vmatpush1.xpose.msra.mxu0 %v138
    %183 = vmatprep.subr.mxu0 0.0
    %184 = vmatpush1.xpose.msra.mxu0 %v141
    %185 = vmatprep.subr.mxu0 0.0
    %186 = vmatpush1.xpose.msra.mxu0 %v144
    %187 = vmatprep.subr.mxu0 0.0
    %188 = vmatpush1.xpose.msra.mxu0 %v147
    %189 = vmatprep.subr.mxu0 0.0
    %190 = vmatpush1.xpose.msra.mxu0 %v150
    %191 = vmatprep.subr.mxu0 0.0
    %192 = vmatpush1.xpose.msra.mxu0 %v153
    %193 = vmatprep.subr.mxu0 0.0
    %194 = vmatpush1.xpose.msra.mxu0 %v156
    %195 = vmatprep.subr.mxu0 0.0
    %196 = vmatpush1.xpose.msra.mxu0 %v159
    %197 = vmatprep.subr.mxu0 0.0
    %198 = vmatpush1.xpose.msra.mxu0 %v162
    %199 = vmatprep.subr.mxu0 0.0
    %200 = vmatpush1.xpose.msra.mxu0 %v165
    %201 = vmatprep.subr.mxu0 0.0
    %202 = vmatpush1.xpose.msra.mxu0 %v168
    %203 = vmatprep.subr.mxu0 0.0
    %204 = vmatpush1.xpose.msra.mxu0 %v171
    %205 = vmatprep.subr.mxu0 0.0
    %206 = vmatpush1.xpose.msra.mxu0 0.0
    %207 = vmatprep.subr.mxu0 0.0
    %208 = vmatpush1.xpose.msra.mxu0 0.0
    %209 = vmatprep.subr.mxu0 0.0
    %210 = vmatpush1.xpose.msra.mxu0 0.0
    %211 = vmatprep.subr.mxu0 0.0
    %212 = vmatpush1.xpose.msra.mxu0 0.0
    %213 = vmatprep.subr.mxu0 0.0
    %214 = vmatpush1.xpose.msra.mxu0 0.0
    %215 = vmatprep.subr.mxu0 0.0
    %216 = vmatpush1.xpose.msra.mxu0 0.0
    %217 = vmatprep.subr.mxu0 0.0
    %218 = vmatpush1.xpose.msra.mxu0 0.0
    %219 = vmatprep.subr.mxu0 0.0
    %220 = vmatpush1.xpose.msra.mxu0 0.0
    %221 = vmatprep.subr.mxu0 0.0
    %222 = vmatpush1.xpose.msra.mxu0 0.0
    %223 = vmatprep.subr.mxu0 0.0
    %224 = vmatpush1.xpose.msra.mxu0 0.0
    %225 = vmatprep.subr.mxu0 0.0
    %226 = vmatpush1.xpose.msra.mxu0 0.0
    %227 = vmatprep.subr.mxu0 0.0
    %228 = vmatpush1.xpose.msra.mxu0 0.0
    %229 = vmatprep.subr.mxu0 0.0
    %230 = vmatpush1.xpose.msra.mxu0 0.0
    %231 = vmatprep.subr.mxu0 0.0
    %232 = vmatpush1.xpose.msra.mxu0 0.0
    %233 = vmatprep.subr.mxu0 0.0
    %234 = vmatpush1.xpose.msra.mxu0 0.0
    %235 = vmatprep.subr.mxu0 0.0
    %236 = vmatpush1.xpose.msra.mxu0 0.0
    %237 = vmatprep.mubr.f32.mxu0 0.0
    %238 = vmatmul.mubr.f32.gmra.mrb[0].mxu0 %v102
    %v239 = vpop.f32.mrb[0].mxu0
    %v240 = vadd.f32 %v63, %v239
    %v241 = vpop.f32.mrb[0].mxu0
    %242 = vmatprep.mubr.f32.mxu0 0.0
    %243 = vmatmul.mubr.f32.gmra.mrb[0].mxu0 %v105
    %v244 = vpop.f32.mrb[0].mxu0
    %v245 = vadd.f32 %v68, %v244
    %v246 = vpop.f32.mrb[0].mxu0
    %247 = vmatprep.mubr.f32.mxu0 0.0
    %248 = vmatmul.mubr.f32.gmra.mrb[0].mxu0 %v108
    %v249 = vpop.f32.mrb[0].mxu0
    %v250 = vadd.f32 %v73, %v249
    %v251 = vpop.f32.mrb[0].mxu0
    %252 = vmatprep.mubr.f32.mxu0 0.0
    %253 = vmatmul.mubr.f32.gmra.mrb[0].mxu0 %v111
    %v254 = vpop.f32.mrb[0].mxu0
    %v255 = vadd.f32 %v78, %v254
    %v256 = vpop.f32.mrb[0].mxu0
    %257 = vmatprep.mubr.f32.mxu0 0.0
    %258 = vmatmul.mubr.f32.gmra.mrb[0].mxu0 %v114
    %v259 = vpop.f32.mrb[0].mxu0
    %v260 = vadd.f32 %v83, %v259
    %v261 = vpop.f32.mrb[0].mxu0
    %262 = vmatprep.mubr.f32.mxu0 0.0
    %263 = vmatmul.mubr.f32.gmra.mrb[0].mxu0 %v117
    %v264 = vpop.f32.mrb[0].mxu0
    %v265 = vadd.f32 %v88, %v264
    %v266 = vpop.f32.mrb[0].mxu0
    %267 = vmatprep.mubr.f32.mxu0 0.0
    %268 = vmatmul.mubr.f32.gmra.mrb[0].mxu0 %v120
    %v269 = vpop.f32.mrb[0].mxu0
    %v270 = vadd.f32 %v93, %v269
    %v271 = vpop.f32.mrb[0].mxu0
    %272 = vmatprep.mubr.f32.mxu0 0.0
    %273 = vmatmul.mubr.f32.gmra.mrb[0].mxu0 %v123
    %v274 = vpop.f32.mrb[0].mxu0
    %v275 = vadd.f32 %v98, %v274
    %v276 = vpop.f32.mrb[0].mxu0
    %277 = vdwg.mxu0
    %v278 = vtanh.pop %v240
    %v279 = vtanh.pop %v245
    %v280 = vtanh.pop %v250
    %v281 = vtanh.pop %v255
    %v282 = vtanh.pop %v260
    %v283 = vtanh.pop %v265
    %v284 = vtanh.pop %v270
    %v285 = vtanh.pop %v275
    %v286 = vld [vmem:[%s3] sm:$0xff]
    %v287 = vld [vmem:[%s3 + $0x8] sm:$0xff]
    %v288 = vld [vmem:[%s3 + $0x10] sm:$0xff]
    %v289 = vld [vmem:[%s3 + $0x18] sm:$0xff]
    %v290 = vld [vmem:[%s3 + $0x20] sm:$0xff]
    %v291 = vld [vmem:[%s3 + $0x28] sm:$0xff]
    %v292 = vld [vmem:[%s3 + $0x30] sm:$0xff]
    %v293 = vld [vmem:[%s3 + $0x38] sm:$0xff]
    %v294 = vld [vmem:[%s4] sm:$0xff]
    %v295 = vld [vmem:[%s4 + $0x8] sm:$0xff]
    %v296 = vld [vmem:[%s4 + $0x10] sm:$0xff]
    %v297 = vld [vmem:[%s4 + $0x18] sm:$0xff]
    %v298 = vld [vmem:[%s4 + $0x20] sm:$0xff]
    %v299 = vld [vmem:[%s4 + $0x28] sm:$0xff]
    %v300 = vld [vmem:[%s4 + $0x30] sm:$0xff]
    %v301 = vld [vmem:[%s4 + $0x38] sm:$0xff]
    %303 = vset.pattern.permute.xlu0 0
    %304 = vperm.xlu0 %303, %v294
    %v305 = vpop.permute.xlu0 %304
    %308 = vset.pattern.permute.xlu0 0
    %309 = vperm.xlu0 %308, %v295
    %v310 = vpop.permute.xlu0 %309
    %313 = vset.pattern.permute.xlu0 0
    %314 = vperm.xlu0 %313, %v296
    %v315 = vpop.permute.xlu0 %314
    %318 = vset.pattern.permute.xlu0 0
    %319 = vperm.xlu0 %318, %v297
    %v320 = vpop.permute.xlu0 %319
    %323 = vset.pattern.permute.xlu0 0
    %324 = vperm.xlu0 %323, %v298
    %v325 = vpop.permute.xlu0 %324
    %328 = vset.pattern.permute.xlu0 0
    %329 = vperm.xlu0 %328, %v299
    %v330 = vpop.permute.xlu0 %329
    %333 = vset.pattern.permute.xlu0 0
    %334 = vperm.xlu0 %333, %v300
    %v335 = vpop.permute.xlu0 %334
    %338 = vset.pattern.permute.xlu0 0
    %339 = vperm.xlu0 %338, %v301
    %v340 = vpop.permute.xlu0 %339
    %vm342 = vcmask 523264
    %v344 = vsel %vm342, %v286, 0
    %v347 = vsel %vm342, %v287, 0
    %v350 = vsel %vm342, %v288, 0
    %v353 = vsel %vm342, %v289, 0
    %v356 = vsel %vm342, %v290, 0
    %v359 = vsel %vm342, %v291, 0
    %v362 = vsel %vm342, %v292, 0
    %v365 = vsel %vm342, %v293, 0
    %367 = vmatprep.subr.mxu0 0.0
    %368 = vmatpush1.msra.mxu0 %v278
    %369 = vmatprep.subr.mxu0 0.0
    %370 = vmatpush1.msra.mxu0 %v279
    %371 = vmatprep.subr.mxu0 0.0
    %372 = vmatpush1.msra.mxu0 %v280
    %373 = vmatprep.subr.mxu0 0.0
    %374 = vmatpush1.msra.mxu0 %v281
    %375 = vmatprep.subr.mxu0 0.0
    %376 = vmatpush1.msra.mxu0 %v282
    %377 = vmatprep.subr.mxu0 0.0
    %378 = vmatpush1.msra.mxu0 %v283
    %379 = vmatprep.subr.mxu0 0.0
    %380 = vmatpush1.msra.mxu0 %v284
    %381 = vmatprep.subr.mxu0 0.0
    %382 = vmatpush1.msra.mxu0 %v285
    %383 = vmatprep.subr.mxu0 0.0
    %384 = vmatpush1.msra.mxu0 0.0
    %385 = vmatprep.subr.mxu0 0.0
    %386 = vmatpush1.msra.mxu0 0.0
    %387 = vmatprep.subr.mxu0 0.0
    %388 = vmatpush1.msra.mxu0 0.0
    %389 = vmatprep.subr.mxu0 0.0
    %390 = vmatpush1.msra.mxu0 0.0
    %391 = vmatprep.subr.mxu0 0.0
    %392 = vmatpush1.msra.mxu0 0.0
    %393 = vmatprep.subr.mxu0 0.0
    %394 = vmatpush1.msra.mxu0 0.0
    %395 = vmatprep.subr.mxu0 0.0
    %396 = vmatpush1.msra.mxu0 0.0
    %397 = vmatprep.subr.mxu0 0.0
    %398 = vmatpush1.msra.mxu0 0.0
    %399 = vmatprep.subr.mxu0 0.0
    %400 = vmatpush1.msra.mxu0 0.0
    %401 = vmatprep.subr.mxu0 0.0
    %402 = vmatpush1.msra.mxu0 0.0
    %403 = vmatprep.subr.mxu0 0.0
    %404 = vmatpush1.msra.mxu0 0.0
    %405 = vmatprep.subr.mxu0 0.0
    %406 = vmatpush1.msra.mxu0 0.0
    %407 = vmatprep.subr.mxu0 0.0
    %408 = vmatpush1.msra.mxu0 0.0
    %409 = vmatprep.subr.mxu0 0.0
    %410 = vmatpush1.msra.mxu0 0.0
    %411 = vmatprep.subr.mxu0 0.0
    %412 = vmatpush1.msra.mxu0 0.0
    %413 = vmatprep.subr.mxu0 0.0
    %414 = vmatpush1.msra.mxu0 0.0
    %415 = vmatprep.subr.mxu0 0.0
    %416 = vmatpush1.msra.mxu0 0.0
    %417 = vmatprep.subr.mxu0 0.0
    %418 = vmatpush1.msra.mxu0 0.0
    %419 = vmatprep.subr.mxu0 0.0
    %420 = vmatpush1.msra.mxu0 0.0
    %421 = vmatprep.subr.mxu0 0.0
    %422 = vmatpush1.msra.mxu0 0.0
    %423 = vmatprep.subr.mxu0 0.0
    %424 = vmatpush1.msra.mxu0 0.0
    %425 = vmatprep.subr.mxu0 0.0
    %426 = vmatpush1.msra.mxu0 0.0
    %427 = vmatprep.subr.mxu0 0.0
    %428 = vmatpush1.msra.mxu0 0.0
    %429 = vmatprep.subr.mxu0 0.0
    %430 = vmatpush1.msra.mxu0 0.0
    %431 = vmatprep.mubr.f32.mxu0 0.0
    %432 = vmatmul.mubr.f32.gmra.mrb[0].mxu0 %v344
    %v433 = vpop.f32.mrb[0].mxu0
    %v434 = vadd.f32 %v305, %v433
    %v435 = vpop.f32.mrb[0].mxu0
    %436 = vmatprep.mubr.f32.mxu0 0.0
    %437 = vmatmul.mubr.f32.gmra.mrb[0].mxu0 %v347
    %v438 = vpop.f32.mrb[0].mxu0
    %v439 = vadd.f32 %v310, %v438
    %v440 = vpop.f32.mrb[0].mxu0
    %441 = vmatprep.mubr.f32.mxu0 0.0
    %442 = vmatmul.mubr.f32.gmra.mrb[0].mxu0 %v350
    %v443 = vpop.f32.mrb[0].mxu0
    %v444 = vadd.f32 %v315, %v443
    %v445 = vpop.f32.mrb[0].mxu0
    %446 = vmatprep.mubr.f32.mxu0 0.0
    %447 = vmatmul.mubr.f32.gmra.mrb[0].mxu0 %v353
    %v448 = vpop.f32.mrb[0].mxu0
    %v449 = vadd.f32 %v320, %v448
    %v450 = vpop.f32.mrb[0].mxu0
    %451 = vmatprep.mubr.f32.mxu0 0.0
    %452 = vmatmul.mubr.f32.gmra.mrb[0].mxu0 %v356
    %v453 = vpop.f32.mrb[0].mxu0
    %v454 = vadd.f32 %v325, %v453
    %v455 = vpop.f32.mrb[0].mxu0
    %456 = vmatprep.mubr.f32.mxu0 0.0
    %457 = vmatmul.mubr.f32.gmra.mrb[0].mxu0 %v359
    %v458 = vpop.f32.mrb[0].mxu0
    %v459 = vadd.f32 %v330, %v458
    %v460 = vpop.f32.mrb[0].mxu0
    %461 = vmatprep.mubr.f32.mxu0 0.0
    %462 = vmatmul.mubr.f32.gmra.mrb[0].mxu0 %v362
    %v463 = vpop.f32.mrb[0].mxu0
    %v464 = vadd.f32 %v335, %v463
    %v465 = vpop.f32.mrb[0].mxu0
    %466 = vmatprep.mubr.f32.mxu0 0.0
    %467 = vmatmul.mubr.f32.gmra.mrb[0].mxu0 %v365
    %v468 = vpop.f32.mrb[0].mxu0
    %v469 = vadd.f32 %v340, %v468
    %v470 = vpop.f32.mrb[0].mxu0
    %471 = vdwg.mxu0
    %v472 = vtanh.pop %v434
    %v473 = vtanh.pop %v439
    %v474 = vtanh.pop %v444
    %v475 = vtanh.pop %v449
    %v476 = vtanh.pop %v454
    %v477 = vtanh.pop %v459
    %v478 = vtanh.pop %v464
    %v479 = vtanh.pop %v469
    %v480 = vld [vmem:[%s5] sm:$0xff]
    %v481 = vld [vmem:[%s5 + $0x8] sm:$0xff]
    %v482 = vld [vmem:[%s5 + $0x10] sm:$0xff]
    %v483 = vld [vmem:[%s5 + $0x18] sm:$0xff]
    %v484 = vld [vmem:[%s5 + $0x20] sm:$0xff]
    %v485 = vld [vmem:[%s5 + $0x28] sm:$0xff]
    %v486 = vld [vmem:[%s5 + $0x30] sm:$0xff]
    %v487 = vld [vmem:[%s5 + $0x38] sm:$0xff]
    %489 = vset.pattern.permute.xlu0 0
    %490 = vperm.xlu0 %489, %v480
    %v491 = vpop.permute.xlu0 %490
    %494 = vset.pattern.permute.xlu0 0
    %495 = vperm.xlu0 %494, %v481
    %v496 = vpop.permute.xlu0 %495
    %499 = vset.pattern.permute.xlu0 0
    %500 = vperm.xlu0 %499, %v482
    %v501 = vpop.permute.xlu0 %500
    %504 = vset.pattern.permute.xlu0 0
    %505 = vperm.xlu0 %504, %v483
    %v506 = vpop.permute.xlu0 %505
    %509 = vset.pattern.permute.xlu0 0
    %510 = vperm.xlu0 %509, %v484
    %v511 = vpop.permute.xlu0 %510
    %514 = vset.pattern.permute.xlu0 0
    %515 = vperm.xlu0 %514, %v485
    %v516 = vpop.permute.xlu0 %515
    %519 = vset.pattern.permute.xlu0 0
    %520 = vperm.xlu0 %519, %v486
    %v521 = vpop.permute.xlu0 %520
    %524 = vset.pattern.permute.xlu0 0
    %525 = vperm.xlu0 %524, %v487
    %v526 = vpop.permute.xlu0 %525
    %v528 = vmul.f32 %v472, %v491
    %v529 = vmul.f32 %v473, %v496
    %v530 = vmul.f32 %v474, %v501
    %v531 = vmul.f32 %v475, %v506
    %v532 = vmul.f32 %v476, %v511
    %v533 = vmul.f32 %v477, %v516
    %v534 = vmul.f32 %v478, %v521
    %v535 = vmul.f32 %v479, %v526
    %v536 = vadd.f32 %v528, %v529
    %v537 = vadd.f32 %v536, %v530
    %v538 = vadd.f32 %v537, %v531
    %v539 = vadd.f32 %v538, %v532
    %v540 = vadd.f32 %v539, %v533
    %v541 = vadd.f32 %v540, %v534
    %v542 = vadd.f32 %v541, %v535
    %v543 = vrot.slane %v542, 4
    %v544 = vadd.f32 %v542, %v543
    %v545 = vrot.slane %v544, 2
    %v546 = vadd.f32 %v544, %v545
    %v547 = vrot.slane %v546, 1
    %v548 = vadd.f32 %v546, %v547
    %s549 = sld [smem:[#allocation2]]
    %v550 = vstv %s549
    %v551 = vadd.f32 %v548, %v550
    %552 = vst [vmem:[#allocation3] sm:$0x1] %v551
    // Predicated region
    $region30: #{tpu_custom_call.1} parent=1 // pred_check
      _
    $region31: #{tpu_custom_call.1} parent=1 // pred_check_branch
      %554 = sbr.rel (0) target = $region33
    $region32: #{tpu_custom_call.1} parent=1 // pred_region
      %s556 = ssub.s32 16, 16
      %557 = vsyncadd [#allocation4], %s556
      %s559 = sshll.u32 [#allocation3], 4
      %s560 = int_to_ptr.vmem [resolvable:$true] %s559
      %562 = dma.vmem_to_hbm [thread:$0]  %s560, 16, %s7, [#allocation4]
    $region33: #{tpu_custom_call.1} parent=1 // pred_fallthru
      _
    // Predicated region
    $region34: #{tpu_custom_call.1} parent=1 // pred_check
      _
    $region35: #{tpu_custom_call.1} parent=1 // pred_check_branch
      %564 = sbr.rel (0) target = $region37
    $region36: #{tpu_custom_call.1} parent=1 // pred_region
      %565 = dma.done [#allocation4], 16
    $region37: #{tpu_custom_call.1} parent=1 // pred_fallthru
      _
    %566 = vsyncpa [#allocation4], 1

</llo_original>
